<compile_context>
chip_gen: v7x
topology: tpu7x:2x2x1
jax: 0.10.0
libtpu: 0.0.40
codegen_flags: <defaults>
</compile_context>

<pallas_src>
import jax
import jax.numpy as jnp
from jax.experimental import pallas as pl
from jax.experimental.pallas import tpu as pltpu


# A_hat streaming dtype. TODO(synk): float8_e4m3 on v7x / int8 on v5e-v6e once
# accuracy is validated — A_hat is the only O(N^2) operand and is streamed 3x.
A_DTYPE = jnp.bfloat16


def _pick_tiles(n_pad):
    """Pick (tm, tk) for the (row-block, reduction-block) grid.

    tk: largest of 512/256/128 dividing n_pad (full-depth pushes into the
        256-wide MXU on v6e/v7x; 128 already matches v5e).
    tm: largest of 512/256/128/64 dividing n_pad that still leaves >= 2 row
        blocks, so the 'parallel' axis keeps both v7x TensorCores busy.
    """
    tk = n_pad
    for cand in (512, 256, 128):
        if n_pad % cand == 0:
            tk = cand
            break
    tm = n_pad
    for cand in (512, 256, 128, 64):
        if n_pad % cand == 0 and n_pad // cand >= 2:
            tm = cand
            break
    return tm, tk


def _leaky_relu(x):
    return jnp.where(x >= 0, x, 0.01 * x)          # F.leaky_relu default slope


def _layer_norm(x, g, b):
    mu = jnp.mean(x, axis=-1, keepdims=True)
    var = jnp.mean(jnp.square(x - mu), axis=-1, keepdims=True)
    return (x - mu) * jax.lax.rsqrt(var + 1e-5) * g + b


# ---------------------------------------------------------------------------
# Kernels
# ---------------------------------------------------------------------------
def gcn_agg_ln_kernel(a_ref, xw_ref, b_ref, g_ref, beta_ref, o_ref, acc_ref):
    """Layer 0: pure aggregation A_hat @ (x W1) [precomputed, lane-dense]
    + bias -> LeakyReLU -> LayerNorm, for one row-block of nodes.

    grid = (row blocks of N, reduction blocks of N); f32 VMEM accumulator.
    """
    k = pl.program_id(1)

    @pl.when(k == 0)
    def _():
        acc_ref[...] = jnp.zeros_like(acc_ref)

    acc_ref[...] += jnp.dot(a_ref[...], xw_ref[...],
                            preferred_element_type=jnp.float32)

    @pl.when(k == pl.num_programs(1) - 1)
    def _():
        h = _leaky_relu(acc_ref[...] + b_ref[...])
        # Dropout(p=0.25) -> inference no-op.
        h = _layer_norm(h, g_ref[...], beta_ref[...])    # f32 statistics
        o_ref[...] = h.astype(o_ref.dtype)


def gcn_mid_layer_kernel(a_ref, x_ref, w_ref, b_ref, g_ref, beta_ref,
                         o_ref, acc_ref):
    """Mid GCN layer: (A_hat @ h) @ W + b -> LeakyReLU -> LayerNorm.

    fin == hidden == 128 so every block is lane dense. The node-wise tail is
    fused into the last reduction step.
    """
    k = pl.program_id(1)

    @pl.when(k == 0)
    def _():
        acc_ref[...] = jnp.zeros_like(acc_ref)

    acc_ref[...] += jnp.dot(a_ref[...], x_ref[...],
                            preferred_element_type=jnp.float32)

    @pl.when(k == pl.num_programs(1) - 1)
    def _():
        agg = acc_ref[...].astype(jnp.bfloat16)          # bf16 MXU operand
        h = jnp.dot(agg, w_ref[...], preferred_element_type=jnp.float32)
        h = _leaky_relu(h + b_ref[...])
        # Dropout(p=0.25) -> inference no-op.
        h = _layer_norm(h, g_ref[...], beta_ref[...])
        o_ref[...] = h.astype(o_ref.dtype)


def gcn_last_layer_kernel(a_ref, x_ref, w_ref, b_ref,
                          wp1_ref, bp1_ref, wp2_ref, bp2_ref,
                          o_ref, acc_ref):
    """Last GCN layer (no LayerNorm) fused with the post_mp MLP head.

    z is stored in bf16 (halves writeback); the pooling reduction that
    consumes it accumulates in f32 outside the kernel.
    """
    k = pl.program_id(1)

    @pl.when(k == 0)
    def _():
        acc_ref[...] = jnp.zeros_like(acc_ref)

    acc_ref[...] += jnp.dot(a_ref[...], x_ref[...],
                            preferred_element_type=jnp.float32)

    @pl.when(k == pl.num_programs(1) - 1)
    def _():
        agg = acc_ref[...].astype(jnp.bfloat16)
        h = jnp.dot(agg, w_ref[...], preferred_element_type=jnp.float32)
        h = _leaky_relu(h + b_ref[...])
        # post_mp: Linear -> Dropout(0.25)[eval no-op] -> Linear
        y = jnp.dot(h.astype(jnp.bfloat16), wp1_ref[...],
                    preferred_element_type=jnp.float32) + bp1_ref[...]
        z = jnp.dot(y.astype(jnp.bfloat16), wp2_ref[...],
                    preferred_element_type=jnp.float32) + bp2_ref[...]
        o_ref[...] = z.astype(o_ref.dtype)


# ---------------------------------------------------------------------------
# pallas_call builders
# ---------------------------------------------------------------------------
def _gcn_agg_ln_call(a_q, xw_bf, b, ln_g, ln_b, tm, tk):
    n = a_q.shape[0]
    hd = xw_bf.shape[1]
    grid = (n // tm, n // tk)
    flops = 2 * n * n * hd
    bytes_acc = a_q.size * a_q.dtype.itemsize + 2 * (xw_bf.size + n * hd)
    return pl.pallas_call(
        gcn_agg_ln_kernel,
        out_shape=jax.ShapeDtypeStruct((n, hd), jnp.bfloat16),
        grid_spec=pltpu.PrefetchScalarGridSpec(
            num_scalar_prefetch=0,
            grid=grid,
            in_specs=[
                pl.BlockSpec((tm, tk), lambda i, k: (i, k)),     # A_hat block
                pl.BlockSpec((tk, hd), lambda i, k: (k, 0)),     # xW1 block
                pl.BlockSpec((1, hd), lambda i, k: (0, 0)),      # bias
                pl.BlockSpec((1, hd), lambda i, k: (0, 0)),      # LN gamma
                pl.BlockSpec((1, hd), lambda i, k: (0, 0)),      # LN beta
            ],
            out_specs=pl.BlockSpec((tm, hd), lambda i, k: (i, 0)),
            scratch_shapes=[pltpu.VMEM((tm, hd), jnp.float32)],
        ),
        compiler_params=pltpu.CompilerParams(
            dimension_semantics=("parallel", "arbitrary")),
        cost_estimate=pl.CostEstimate(flops=int(flops),
                                      transcendentals=int(n),
                                      bytes_accessed=int(bytes_acc)),
    )(a_q, xw_bf, b, ln_g, ln_b)


def _gcn_mid_layer_call(a_q, x_bf, w, b, ln_g, ln_b, tm, tk):
    n = a_q.shape[0]
    fin = x_bf.shape[1]
    hd = w.shape[1]
    grid = (n // tm, n // tk)
    flops = 2 * n * n * fin + 2 * n * fin * hd
    bytes_acc = (a_q.size * a_q.dtype.itemsize
                 + 2 * (x_bf.size + w.size + n * hd))
    return pl.pallas_call(
        gcn_mid_layer_kernel,
        out_shape=jax.ShapeDtypeStruct((n, hd), jnp.bfloat16),
        grid_spec=pltpu.PrefetchScalarGridSpec(
            num_scalar_prefetch=0,
            grid=grid,
            in_specs=[
                pl.BlockSpec((tm, tk), lambda i, k: (i, k)),     # A_hat block
                pl.BlockSpec((tk, fin), lambda i, k: (k, 0)),    # h block
                pl.BlockSpec((fin, hd), lambda i, k: (0, 0)),    # W
                pl.BlockSpec((1, hd), lambda i, k: (0, 0)),      # bias
                pl.BlockSpec((1, hd), lambda i, k: (0, 0)),      # LN gamma
                pl.BlockSpec((1, hd), lambda i, k: (0, 0)),      # LN beta
            ],
            out_specs=pl.BlockSpec((tm, hd), lambda i, k: (i, 0)),
            scratch_shapes=[pltpu.VMEM((tm, fin), jnp.float32)],
        ),
        compiler_params=pltpu.CompilerParams(
            dimension_semantics=("parallel", "arbitrary")),
        cost_estimate=pl.CostEstimate(flops=int(flops),
                                      transcendentals=int(n),
                                      bytes_accessed=int(bytes_acc)),
    )(a_q, x_bf, w, b, ln_g, ln_b)


def _gcn_last_layer_call(a_q, x_bf, w, b, wp1, bp1, wp2, bp2, tm, tk):
    n = a_q.shape[0]
    fin = x_bf.shape[1]
    hd = w.shape[1]
    mid = wp1.shape[1]
    out = wp2.shape[1]
    grid = (n // tm, n // tk)
    flops = 2 * n * n * fin + 2 * n * (fin * hd + hd * mid + mid * out)
    bytes_acc = (a_q.size * a_q.dtype.itemsize
                 + 2 * (x_bf.size + w.size + wp1.size + wp2.size + n * out))
    return pl.pallas_call(
        gcn_last_layer_kernel,
        out_shape=jax.ShapeDtypeStruct((n, out), jnp.bfloat16),
        grid_spec=pltpu.PrefetchScalarGridSpec(
            num_scalar_prefetch=0,
            grid=grid,
            in_specs=[
                pl.BlockSpec((tm, tk), lambda i, k: (i, k)),     # A_hat block
                pl.BlockSpec((tk, fin), lambda i, k: (k, 0)),    # h block
                pl.BlockSpec((fin, hd), lambda i, k: (0, 0)),    # W3
                pl.BlockSpec((1, hd), lambda i, k: (0, 0)),      # b3
                pl.BlockSpec((hd, mid), lambda i, k: (0, 0)),    # Wp1
                pl.BlockSpec((1, mid), lambda i, k: (0, 0)),     # bp1
                pl.BlockSpec((mid, out), lambda i, k: (0, 0)),   # Wp2
                pl.BlockSpec((1, out), lambda i, k: (0, 0)),     # bp2
            ],
            out_specs=pl.BlockSpec((tm, out), lambda i, k: (i, 0)),
            scratch_shapes=[pltpu.VMEM((tm, fin), jnp.float32)],
        ),
        compiler_params=pltpu.CompilerParams(
            dimension_semantics=("parallel", "arbitrary")),
        cost_estimate=pl.CostEstimate(flops=int(flops),
                                      transcendentals=0,
                                      bytes_accessed=int(bytes_acc)),
    )(a_q, x_bf, w, b, wp1, bp1, wp2, bp2)


# ---------------------------------------------------------------------------
# Forward pass
# ---------------------------------------------------------------------------
def gnn_encoder_forward(params, x, edge_index, edge_weight, batch, num_graphs):
    """Dense A_hat glue in plain JAX, hot path in Pallas kernels."""
    n, fin = x.shape
    src, dst = edge_index[0], edge_index[1]

    # Pad node dim to a multiple of 128 so every block is sublane/lane aligned.
    n_pad = max(128, int(pl.cdiv(n, 128)) * 128)
    pad = n_pad - n
    tm, tk = _pick_tiles(n_pad)

    # Dense weighted adjacency built directly at the padded shape:
    # A[dst, src] += w, self loops, then symmetric D^-1/2 (A+I) D^-1/2
    # normalization (PyG GCNConv semantics). Normalization + dtype cast are one
    # fused elementwise expression — no separate pad/cast passes over O(N^2).
    a = jnp.zeros((n_pad, n_pad), jnp.float32).at[dst, src].add(edge_weight)
    a = a + jnp.eye(n_pad, dtype=jnp.float32)
    deg = jnp.sum(a, axis=1)
    dinv = jax.lax.rsqrt(jnp.maximum(deg, 1e-12))
    a_q = (a * dinv[:, None] * dinv[None, :]).astype(A_DTYPE)

    bf = jnp.bfloat16
    # Layer 0 pre-transform: xW1 is (N, fin) @ (fin, hidden) — trivially cheap
    # and makes the layer-0 aggregation lane dense (fin=8 blocks would pad to
    # 128 lanes in vregs anyway and produce masked loads/stores).
    x_p = jnp.pad(x, ((0, pad), (0, 0)))
    xw1 = jnp.dot(x_p, params["w1"]).astype(bf)

    # layer 0: aggregation-only kernel (W folded in above) + leaky_relu + LN
    h = _gcn_agg_ln_call(a_q, xw1, params["b1"],
                         params["ln1_g"], params["ln1_b"], tm, tk)
    # layer 1: GCNConv -> leaky_relu -> (dropout no-op) -> LayerNorm
    h = _gcn_mid_layer_call(a_q, h,
                            params["w2"].astype(bf), params["b2"],
                            params["ln2_g"], params["ln2_b"], tm, tk)
    # layer 2 (no LN) fused with post_mp MLP head; z emitted in bf16
    z = _gcn_last_layer_call(a_q, h,
                             params["w3"].astype(bf), params["b3"],
                             params["wp1"].astype(bf), params["bp1"],
                             params["wp2"].astype(bf), params["bp2"], tm, tk)

    # global_mean_pool: with num_graphs ~ 2 a dedicated kernel is pure overhead
    # (2/128 MXU occupancy); a plain-jnp matmul with f32 accumulation is ideal.
    # Padded rows carry junk activations but their pool weight is exactly 0.
    batch_p = jnp.pad(batch, (0, pad), constant_values=-1)
    onehot = (batch_p[None, :] == jnp.arange(num_graphs)[:, None]).astype(jnp.float32)
    counts = jnp.maximum(onehot.sum(axis=1, keepdims=True), 1.0)
    pooled = jnp.dot(onehot, z.astype(jnp.float32)) / counts
    return pooled


def init_params(key, input_dim, hidden_dim, output_dim):
    ks = jax.random.split(key, 6)
    s = 0.1
    return {
        "w1": s * jax.random.normal(ks[0], (input_dim, hidden_dim), jnp.float32),
        "b1": jnp.zeros((1, hidden_dim), jnp.float32),
        "w2": s * jax.random.normal(ks[1], (hidden_dim, hidden_dim), jnp.float32),
        "b2": jnp.zeros((1, hidden_dim), jnp.float32),
        "w3": s * jax.random.normal(ks[2], (hidden_dim, hidden_dim), jnp.float32),
        "b3": jnp.zeros((1, hidden_dim), jnp.float32),
        "ln1_g": jnp.ones((1, hidden_dim), jnp.float32),
        "ln1_b": jnp.zeros((1, hidden_dim), jnp.float32),
        "ln2_g": jnp.ones((1, hidden_dim), jnp.float32),
        "ln2_b": jnp.zeros((1, hidden_dim), jnp.float32),
        "wp1": s * jax.random.normal(ks[3], (hidden_dim, output_dim // 2), jnp.float32),
        "bp1": 0.01 * jnp.ones((1, output_dim // 2), jnp.float32),
        "wp2": s * jax.random.normal(ks[4], (output_dim // 2, output_dim), jnp.float32),
        "bp2": 0.01 * jnp.ones((1, output_dim), jnp.float32),
    }


if __name__ == "__main__":
    # Small synthetic graph batch: 16 nodes, 40 edges, 2 graphs.
    # Lane-dense hidden/output dims (128).
    N, E, G = 16, 40, 2
    INPUT_DIM, HIDDEN_DIM, OUTPUT_DIM = 8, 128, 128

    key = jax.random.PRNGKey(0)
    k_x, k_src, k_dst, k_w, k_p = jax.random.split(key, 5)

    x = jax.random.normal(k_x, (N, INPUT_DIM), jnp.float32)
    edge_index = jnp.stack([
        jax.random.randint(k_src, (E,), 0, N),
        jax.random.randint(k_dst, (E,), 0, N),
    ])                                                                # [2, E]
    # TODO(synk): edge_attr is 3-dim only for the GAT branch; the GCN branch
    # treats it as a scalar edge_weight, which is what we model here.
    edge_attr = jax.random.uniform(k_w, (E,), jnp.float32, 0.5, 1.5)  # [E]
    batch = jnp.concatenate([jnp.zeros((N // 2,), jnp.int32),
                             jnp.ones((N - N // 2,), jnp.int32)])     # [N]

    params = init_params(k_p, INPUT_DIM, HIDDEN_DIM, OUTPUT_DIM)

    out = gnn_encoder_forward(params, x, edge_index, edge_attr, batch, G)
    out = jax.block_until_ready(out)
    assert out.shape == (G, OUTPUT_DIM)
    assert bool(jnp.all(jnp.isfinite(out)))
    print("KERNEL_OK")
</pallas_src>

<mosaic_0001>
module attributes {stable_mosaic.version = 11 : i64} {
  func.func @gcn_agg_ln_kernel(%arg0: i32, %arg1: i32, %arg2: memref<64x128xbf16, #tpu.memory_space<vmem>>, %arg3: memref<128x128xbf16, #tpu.memory_space<vmem>>, %arg4: memref<1x128xf32, #tpu.memory_space<vmem>>, %arg5: memref<1x128xf32, #tpu.memory_space<vmem>>, %arg6: memref<1x128xf32, #tpu.memory_space<vmem>>, %arg7: memref<64x128xbf16, #tpu.memory_space<vmem>>, %arg8: memref<64x128xf32, #tpu.memory_space<vmem>>) attributes {dimension_semantics = [#tpu.dimension_semantics<parallel>, #tpu.dimension_semantics<arbitrary>], iteration_bounds = array<i64: 2, 1>, scalar_prefetch = 0 : i64, scratch_operands = 1 : i64, tpu.core_type = #tpu.core_type<tc>, window_params = [{transform_indices = @transform_0, window_bounds = array<i64: 64, 128>}, {transform_indices = @transform_1, window_bounds = array<i64: 128, 128>}, {pipeline_mode = #tpu.pipeline_mode<synchronous>, transform_indices = @transform_2, window_bounds = array<i64: 1, 128>}, {pipeline_mode = #tpu.pipeline_mode<synchronous>, transform_indices = @transform_3, window_bounds = array<i64: 1, 128>}, {pipeline_mode = #tpu.pipeline_mode<synchronous>, transform_indices = @transform_4, window_bounds = array<i64: 1, 128>}, {transform_indices = @transform_5, window_bounds = array<i64: 64, 128>}]} {
    %c0_i32 = arith.constant 0 : i32
    %0 = arith.cmpi eq, %arg1, %c0_i32 : i32
    %1 = arith.extui %0 : i1 to i32
    %c0_i32_0 = arith.constant 0 : i32
    %2 = arith.cmpi ne, %1, %c0_i32_0 : i32
    scf.if %2 {
      %cst_10 = arith.constant 0.000000e+00 : f32
      %12 = vector.broadcast %cst_10 : f32 to vector<64x128xf32>
      %c0_11 = arith.constant 0 : index
      %c0_12 = arith.constant 0 : index
      %13 = vector.load %arg8[%c0_11, %c0_12] : memref<64x128xf32, #tpu.memory_space<vmem>>, vector<64x128xf32>
      tpu.vector_store %arg8[%c0_11, %c0_12], %12 {strides = array<i32>} : memref<64x128xf32, #tpu.memory_space<vmem>>, vector<64x128xf32>,
    } else {
    }
    %c0 = arith.constant 0 : index
    %c0_1 = arith.constant 0 : index
    %3 = vector.load %arg8[%c0, %c0_1] : memref<64x128xf32, #tpu.memory_space<vmem>>, vector<64x128xf32>
    %c0_2 = arith.constant 0 : index
    %c0_3 = arith.constant 0 : index
    %4 = vector.load %arg2[%c0_2, %c0_3] : memref<64x128xbf16, #tpu.memory_space<vmem>>, vector<64x128xbf16>
    %c0_4 = arith.constant 0 : index
    %c0_5 = arith.constant 0 : index
    %5 = vector.load %arg3[%c0_4, %c0_5] : memref<128x128xbf16, #tpu.memory_space<vmem>>, vector<128x128xbf16>
    %cst = arith.constant dense<0.000000e+00> : vector<64x128xf32>
    %6 = tpu.matmul %4, %5, %cst {dimension_numbers = #tpu.dot_dimension_numbers<[1], [0], [0], [1], [0, 0, 1, 1], [], []>} : vector<64x128xbf16>, vector<128x128xbf16>, vector<64x128xf32> -> vector<64x128xf32>
    %7 = arith.addf %3, %6 : vector<64x128xf32>
    %c0_6 = arith.constant 0 : index
    %c0_7 = arith.constant 0 : index
    %8 = vector.load %arg8[%c0_6, %c0_7] : memref<64x128xf32, #tpu.memory_space<vmem>>, vector<64x128xf32>
    tpu.vector_store %arg8[%c0_6, %c0_7], %7 {strides = array<i32>} : memref<64x128xf32, #tpu.memory_space<vmem>>, vector<64x128xf32>,
    %c0_i32_8 = arith.constant 0 : i32
    %9 = arith.cmpi eq, %arg1, %c0_i32_8 : i32
    %10 = arith.extui %9 : i1 to i32
    %c0_i32_9 = arith.constant 0 : i32
    %11 = arith.cmpi ne, %10, %c0_i32_9 : i32
    scf.if %11 {
      %c0_10 = arith.constant 0 : index
      %c0_11 = arith.constant 0 : index
      %12 = vector.load %arg8[%c0_10, %c0_11] : memref<64x128xf32, #tpu.memory_space<vmem>>, vector<64x128xf32>
      %c0_12 = arith.constant 0 : index
      %c0_13 = arith.constant 0 : index
      %13 = vector.load %arg4[%c0_12, %c0_13] : memref<1x128xf32, #tpu.memory_space<vmem>>, vector<1x128xf32>
      %14 = vector.broadcast %13 : vector<1x128xf32> to vector<64x128xf32>
      %15 = arith.addf %12, %14 : vector<64x128xf32>
      %cst_14 = arith.constant 0.000000e+00 : f32
      %16 = vector.broadcast %cst_14 : f32 to vector<64x128xf32>
      %17 = arith.cmpf oge, %15, %16 : vector<64x128xf32>
      %cst_15 = arith.constant 0.00999999977 : f32
      %18 = vector.broadcast %cst_15 : f32 to vector<64x128xf32>
      %19 = arith.mulf %18, %15 : vector<64x128xf32>
      %20 = arith.select %17, %15, %19 : vector<64x128xi1>, vector<64x128xf32>
      %c0_16 = arith.constant 0 : index
      %c0_17 = arith.constant 0 : index
      %21 = vector.load %arg5[%c0_16, %c0_17] : memref<1x128xf32, #tpu.memory_space<vmem>>, vector<1x128xf32>
      %c0_18 = arith.constant 0 : index
      %c0_19 = arith.constant 0 : index
      %22 = vector.load %arg6[%c0_18, %c0_19] : memref<1x128xf32, #tpu.memory_space<vmem>>, vector<1x128xf32>
      %cst_20 = arith.constant dense<0.000000e+00> : vector<64xf32>
      %23 = vector.multi_reduction <add>, %20, %cst_20 [1] : vector<64x128xf32> to vector<64xf32>
      %24 = vector.shape_cast %23 : vector<64xf32> to vector<64x1xf32>
      %cst_21 = arith.constant 1.280000e+02 : f32
      %25 = vector.broadcast %cst_21 : f32 to vector<64x1xf32>
      %26 = arith.divf %24, %25 : vector<64x1xf32>
      %27 = vector.broadcast %26 : vector<64x1xf32> to vector<64x128xf32>
      %28 = arith.subf %20, %27 : vector<64x128xf32>
      %29 = arith.mulf %28, %28 : vector<64x128xf32>
      %cst_22 = arith.constant dense<0.000000e+00> : vector<64xf32>
      %30 = vector.multi_reduction <add>, %29, %cst_22 [1] : vector<64x128xf32> to vector<64xf32>
      %31 = vector.shape_cast %30 : vector<64xf32> to vector<64x1xf32>
      %cst_23 = arith.constant 1.280000e+02 : f32
      %32 = vector.broadcast %cst_23 : f32 to vector<64x1xf32>
      %33 = arith.divf %31, %32 : vector<64x1xf32>
      %34 = vector.broadcast %26 : vector<64x1xf32> to vector<64x128xf32>
      %35 = arith.subf %20, %34 : vector<64x128xf32>
      %cst_24 = arith.constant 9.99999974E-6 : f32
      %36 = vector.broadcast %cst_24 : f32 to vector<64x1xf32>
      %37 = arith.addf %33, %36 : vector<64x1xf32>
      %38 = math.rsqrt %37 : vector<64x1xf32>
      %39 = vector.broadcast %38 : vector<64x1xf32> to vector<64x128xf32>
      %40 = arith.mulf %35, %39 : vector<64x128xf32>
      %41 = vector.broadcast %21 : vector<1x128xf32> to vector<64x128xf32>
      %42 = arith.mulf %40, %41 : vector<64x128xf32>
      %43 = vector.broadcast %22 : vector<1x128xf32> to vector<64x128xf32>
      %44 = arith.addf %42, %43 : vector<64x128xf32>
      %45 = arith.truncf %44 : vector<64x128xf32> to vector<64x128xbf16>
      %c0_25 = arith.constant 0 : index
      %c0_26 = arith.constant 0 : index
      %46 = vector.load %arg7[%c0_25, %c0_26] : memref<64x128xbf16, #tpu.memory_space<vmem>>, vector<64x128xbf16>
      tpu.vector_store %arg7[%c0_25, %c0_26], %45 {strides = array<i32>} : memref<64x128xbf16, #tpu.memory_space<vmem>>, vector<64x128xbf16>,
    } else {
    }
    return
  }
  func.func @transform_0(%arg0: i32, %arg1: i32) -> (i32, i32) {
    %c0_i32 = arith.constant 0 : i32
    return %arg0, %arg1 : i32, i32
  }
  func.func @transform_1(%arg0: i32, %arg1: i32) -> (i32, i32) {
    %c0_i32 = arith.constant 0 : i32
    %c0_i32_0 = arith.constant 0 : i32
    return %arg1, %c0_i32 : i32, i32
  }
  func.func @transform_2(%arg0: i32, %arg1: i32) -> (i32, i32) {
    %c0_i32 = arith.constant 0 : i32
    %c0_i32_0 = arith.constant 0 : i32
    %c0_i32_1 = arith.constant 0 : i32
    return %c0_i32, %c0_i32_0 : i32, i32
  }
  func.func @transform_3(%arg0: i32, %arg1: i32) -> (i32, i32) {
    %c0_i32 = arith.constant 0 : i32
    %c0_i32_0 = arith.constant 0 : i32
    %c0_i32_1 = arith.constant 0 : i32
    return %c0_i32, %c0_i32_0 : i32, i32
  }
  func.func @transform_4(%arg0: i32, %arg1: i32) -> (i32, i32) {
    %c0_i32 = arith.constant 0 : i32
    %c0_i32_0 = arith.constant 0 : i32
    %c0_i32_1 = arith.constant 0 : i32
    return %c0_i32, %c0_i32_0 : i32, i32
  }
  func.func @transform_5(%arg0: i32, %arg1: i32) -> (i32, i32) {
    %c0_i32 = arith.constant 0 : i32
    %c0_i32_0 = arith.constant 0 : i32
    return %arg0, %c0_i32 : i32, i32
  }
}

</mosaic_0001>

<llo_original>
// kernel: tpu_custom_call.1
$region0: #{tpu_custom_call.1}
  #allocation0 [shape = 'u32[]', space=smem, size = 0x4, offset = 0x4, fixed_abs, tag = 'smem constant byte address 0x4 - core index']
  #allocation1 [shape = 'u32[144,128]{1,0:T(1,128)}', space=vmem, size = 0x12000, scoped, tag = 'internal scratch']
  #allocation2 [shape = 'f32[64,128]{1,0:T(8,128)}', space=vmem, size = 0x8000, scoped, tag = 'scratch operand']
  %s0 = inlined_call_operand.hbm [shape: bf16[128,128], index: 0, kind: input, shape index: {}]
  %s1 = inlined_call_operand.hbm [shape: bf16[128,128], index: 1, kind: input, shape index: {}]
  %s2 = inlined_call_operand.vmem [shape: f32[1,128], index: 2, kind: input, shape index: {}]
  %s3 = inlined_call_operand.vmem [shape: f32[1,128], index: 3, kind: input, shape index: {}]
  %s4 = inlined_call_operand.vmem [shape: f32[1,128], index: 4, kind: input, shape index: {}]
  %s5 = inlined_call_operand.hbm [shape: bf16[128,128], index: 5, kind: output, shape index: {}]
  %s6 = sld [smem:[#allocation0]]
  $region69: #{tpu_custom_call.1} parent=0
    _
  %s8 = ssub.s32 1, %s6
  %s9 = scalar_select 0, %s8, %s6
  $region1: #{tpu_custom_call.1} parent=0
    #allocation3 [shape = 'u8[32768]{0}', space=vmem, size = 0x8000, scoped, tag = 'input window, operand 0']
    #allocation4 [shape = 's32[2]{0}', space=sflag, size = 0x8, scoped, tag = 'scoped memory for tpu_custom_call.1']
    #allocation5 [shape = 's32[2]{0}', space=sflag, size = 0x8, scoped, tag = 'scoped memory for tpu_custom_call.1']
    #allocation6 [shape = 'u8[32768]{0}', space=vmem, size = 0x8000, scoped, tag = 'input window, operand 1, single buffered']
    #allocation7 [shape = 's32[1]{0}', space=sflag, size = 0x4, scoped, tag = 'scoped memory for tpu_custom_call.1']
    #allocation8 [shape = 'u8[32768]{0}', space=vmem, size = 0x8000, scoped, tag = 'output window, operand 0']
    %10 = vsyncpa [#allocation4], 0
    %s11 = scalar_lea.sflag [#allocation4], 1
    %12 = vsyncpa %s11, 0
    %13 = vsyncpa [#allocation7], 0
    %14 = vsyncpa [#allocation5], 0
    %s15 = scalar_lea.sflag [#allocation5], 1
    %16 = vsyncpa %s15, 0
    loop: start=0, step=1, limit=4
    $region2: #{tpu_custom_call.1} parent=1 // loop_pre_header
      _
    $region3: #{tpu_custom_call.1} parent=1 // loop_header
      %s18 = sphi 0, %s22
      %p19 = scmp.ge.s32.totalorder %s18, 4
      %s25 = sphi 0, %s37
      %s26 = sphi 0, %s33
      %s27 = sphi 0, %s25
      %s28 = sphi 0, %s26
      %s29 = sphi 0, %s27
      %s30 = sphi 0, %s28
      %s42 = sphi 0, %s44
      %s45 = sphi 0, %s42
      %s46 = sphi 0, %s45
      %s62 = sphi 0, %s46
      %s68 = sphi 0, %s70
      %s71 = sphi 0, %s68
      %s72 = sphi 0, %s71
      %s88 = sphi 0, %s72
      %s92 = sphi 0, %s92
      %s94 = sphi 0, %s92
      %s95 = sphi 0, %s94
      %s109 = sphi 0, %s95
      %s113 = sphi 0, %s113
      %s115 = sphi 0, %s113
      %s116 = sphi 0, %s115
      %s130 = sphi 0, %s116
      %s134 = sphi 0, %s134
      %s136 = sphi 0, %s134
      %s137 = sphi 0, %s136
      %s151 = sphi 0, %s137
      %s157 = sphi 0, %s159
      %s160 = sphi 0, %s157
      %s161 = sphi 0, %s160
      %s177 = sphi 0, %s161
    $region4: #{tpu_custom_call.1} parent=1 // loop_header_branch
      %21 = sbr.rel (%p19) target = $region8
    $region5: #{tpu_custom_call.1} parent=1 // loop_body
      %s23 = ssub.s32 %s18, 1
      %s24 = ssub.s32 %s18, 2
      %s31 = sadd.s32 1, %s26
      %p32 = scmp.ge.s32.totalorder %s31, 1
      %s33 = scalar_select %p32, 0, %s31
      %s34 = sadd.s32 1, %s25
      %s35 = scalar_select %p32, %s34, %s25
      %p36 = scmp.ge.s32.totalorder %s35, 2
      %s37 = scalar_select %p36, 0, %s35
      %s38 = ssub.s32 %s25, %s37
      %s39 = ssub.s32 %s26, %s33
      %s40 = sor.u32 %s38, %s39
      %p41 = scmp.eq.s32.totalorder %s40, 0
      %s43 = sadd.s32 %s42, 1
      %s44 = scalar_select %p41, %s42, %s43
      %p47 = pneg %p41
      %p48 = scmp.eq.s32.totalorder %s18, 1
      %p49 = por %p47, %p48
      %p50 = scmp.ne.s32.totalorder %s42, %s45
      %p51 = scmp.eq.s32.totalorder %s18, 0
      %p52 = por %p50, %p51
      %p53 = scmp.ne.s32.totalorder %s42, %s45
      %p54 = scmp.eq.s32.totalorder %s23, 1
      %p55 = por %p53, %p54
      %p56 = scmp.ne.s32.totalorder %s45, %s46
      %p57 = scmp.eq.s32.totalorder %s23, 0
      %p58 = por %p56, %p57
      %p59 = scmp.ne.s32.totalorder %s45, %s46
      %p60 = scmp.eq.s32.totalorder %s24, 1
      %p61 = por %p59, %p60
      %p63 = scmp.ne.s32.totalorder %s46, %s62
      %p64 = scmp.eq.s32.totalorder %s24, 0
      %p65 = por %p63, %p64
      %s66 = ssub.s32 %s26, %s33
      %p67 = scmp.eq.s32.totalorder %s66, 0
      %s69 = sadd.s32 %s68, 1
      %s70 = scalar_select %p67, %s68, %s69
      %p73 = pneg %p67
      %p74 = scmp.eq.s32.totalorder %s18, 1
      %p75 = por %p73, %p74
      %p76 = scmp.ne.s32.totalorder %s68, %s71
      %p77 = scmp.eq.s32.totalorder %s18, 0
      %p78 = por %p76, %p77
      %p79 = scmp.ne.s32.totalorder %s68, %s71
      %p80 = scmp.eq.s32.totalorder %s23, 1
      %p81 = por %p79, %p80
      %p82 = scmp.ne.s32.totalorder %s71, %s72
      %p83 = scmp.eq.s32.totalorder %s23, 0
      %p84 = por %p82, %p83
      %p85 = scmp.ne.s32.totalorder %s71, %s72
      %p86 = scmp.eq.s32.totalorder %s24, 1
      %p87 = por %p85, %p86
      %p89 = scmp.ne.s32.totalorder %s72, %s88
      %p90 = scmp.eq.s32.totalorder %s24, 0
      %p91 = por %p89, %p90
      %s93 = sadd.s32 %s92, 1
      %p96 = scmp.eq.s32.totalorder %s18, 1
      %p97 = scmp.ne.s32.totalorder %s92, %s94
      %p98 = scmp.eq.s32.totalorder %s18, 0
      %p99 = por %p97, %p98
      %p100 = scmp.ne.s32.totalorder %s92, %s94
      %p101 = scmp.eq.s32.totalorder %s23, 1
      %p102 = por %p100, %p101
      %p103 = scmp.ne.s32.totalorder %s94, %s95
      %p104 = scmp.eq.s32.totalorder %s23, 0
      %p105 = por %p103, %p104
      %p106 = scmp.ne.s32.totalorder %s94, %s95
      %p107 = scmp.eq.s32.totalorder %s24, 1
      %p108 = por %p106, %p107
      %p110 = scmp.ne.s32.totalorder %s95, %s109
      %p111 = scmp.eq.s32.totalorder %s24, 0
      %p112 = por %p110, %p111
      %s114 = sadd.s32 %s113, 1
      %p117 = scmp.eq.s32.totalorder %s18, 1
      %p118 = scmp.ne.s32.totalorder %s113, %s115
      %p119 = scmp.eq.s32.totalorder %s18, 0
      %p120 = por %p118, %p119
      %p121 = scmp.ne.s32.totalorder %s113, %s115
      %p122 = scmp.eq.s32.totalorder %s23, 1
      %p123 = por %p121, %p122
      %p124 = scmp.ne.s32.totalorder %s115, %s116
      %p125 = scmp.eq.s32.totalorder %s23, 0
      %p126 = por %p124, %p125
      %p127 = scmp.ne.s32.totalorder %s115, %s116
      %p128 = scmp.eq.s32.totalorder %s24, 1
      %p129 = por %p127, %p128
      %p131 = scmp.ne.s32.totalorder %s116, %s130
      %p132 = scmp.eq.s32.totalorder %s24, 0
      %p133 = por %p131, %p132
      %s135 = sadd.s32 %s134, 1
      %p138 = scmp.eq.s32.totalorder %s18, 1
      %p139 = scmp.ne.s32.totalorder %s134, %s136
      %p140 = scmp.eq.s32.totalorder %s18, 0
      %p141 = por %p139, %p140
      %p142 = scmp.ne.s32.totalorder %s134, %s136
      %p143 = scmp.eq.s32.totalorder %s23, 1
      %p144 = por %p142, %p143
      %p145 = scmp.ne.s32.totalorder %s136, %s137
      %p146 = scmp.eq.s32.totalorder %s23, 0
      %p147 = por %p145, %p146
      %p148 = scmp.ne.s32.totalorder %s136, %s137
      %p149 = scmp.eq.s32.totalorder %s24, 1
      %p150 = por %p148, %p149
      %p152 = scmp.ne.s32.totalorder %s137, %s151
      %p153 = scmp.eq.s32.totalorder %s24, 0
      %p154 = por %p152, %p153
      %s155 = ssub.s32 %s25, %s37
      %p156 = scmp.eq.s32.totalorder %s155, 0
      %s158 = sadd.s32 %s157, 1
      %s159 = scalar_select %p156, %s157, %s158
      %p162 = pneg %p156
      %p163 = scmp.eq.s32.totalorder %s18, 1
      %p164 = por %p162, %p163
      %p165 = scmp.ne.s32.totalorder %s157, %s160
      %p166 = scmp.eq.s32.totalorder %s18, 0
      %p167 = por %p165, %p166
      %p168 = scmp.ne.s32.totalorder %s157, %s160
      %p169 = scmp.eq.s32.totalorder %s23, 1
      %p170 = por %p168, %p169
      %p171 = scmp.ne.s32.totalorder %s160, %s161
      %p172 = scmp.eq.s32.totalorder %s23, 0
      %p173 = por %p171, %p172
      %p174 = scmp.ne.s32.totalorder %s160, %s161
      %p175 = scmp.eq.s32.totalorder %s24, 1
      %p176 = por %p174, %p175
      %p178 = scmp.ne.s32.totalorder %s161, %s177
      %p179 = scmp.eq.s32.totalorder %s24, 0
      %p180 = por %p178, %p179
      %p181 = scmp.le.s32.totalorder 1, %s18
      %p182 = scmp.lt.s32.totalorder %s18, 3
      %p183 = pnand %p181, %p182
      %p184 = pneg %p183
      // Predicated region
      $region9: #{tpu_custom_call.1} parent=5 // pred_check
        _
      $region10: #{tpu_custom_call.1} parent=5 // pred_check_branch
        %186 = sbr.rel (%p183) target = $region12
      $region11: #{tpu_custom_call.1} parent=5 // pred_region
        %s187 = ssub.s32 %s18, 1
        // Predicated region
        $region13: #{tpu_custom_call.1} parent=11 // pred_check
          %p188 = pneg %p84
        $region14: #{tpu_custom_call.1} parent=11 // pred_check_branch
          %190 = sbr.rel (%p188) target = $region16
        $region15: #{tpu_custom_call.1} parent=11 // pred_region
          %s191 = smul.u32 16, %s28
          %s193 = ssub.s32 1024, 1024
          %194 = vsyncadd [#allocation7], %s193
          %s195 = smul.addr %s191, 64
          %s196 = scalar_lea.hbm %s1, %s195
          %s197 = sshll.u32 [#allocation6], 4
          %s198 = int_to_ptr.vmem [resolvable:$true] %s197
          %203 = dma.hbm_to_vmem [thread:$0]  %s196, 1024, %s198, [#allocation7], 64, 64, 4
        $region16: #{tpu_custom_call.1} parent=11 // pred_fallthru
          _
        // Predicated region
        $region17: #{tpu_custom_call.1} parent=11 // pred_check
          %p204 = pneg %p105
        $region18: #{tpu_custom_call.1} parent=11 // pred_check_branch
          %206 = sbr.rel (%p204) target = $region20
        $region19: #{tpu_custom_call.1} parent=11 // pred_region
          _
        $region20: #{tpu_custom_call.1} parent=11 // pred_fallthru
          _
        // Predicated region
        $region21: #{tpu_custom_call.1} parent=11 // pred_check
          %p207 = pneg %p126
        $region22: #{tpu_custom_call.1} parent=11 // pred_check_branch
          %209 = sbr.rel (%p207) target = $region24
        $region23: #{tpu_custom_call.1} parent=11 // pred_region
          _
        $region24: #{tpu_custom_call.1} parent=11 // pred_fallthru
          _
        // Predicated region
        $region25: #{tpu_custom_call.1} parent=11 // pred_check
          %p210 = pneg %p147
        $region26: #{tpu_custom_call.1} parent=11 // pred_check_branch
          %212 = sbr.rel (%p210) target = $region28
        $region27: #{tpu_custom_call.1} parent=11 // pred_region
          _
        $region28: #{tpu_custom_call.1} parent=11 // pred_fallthru
          _
      $region12: #{tpu_custom_call.1} parent=5 // pred_fallthru
        _
      %p213 = scmp.lt.s32.totalorder %s18, 2
      // Predicated region
      $region29: #{tpu_custom_call.1} parent=5 // pred_check
        %p214 = pneg %p213
      $region30: #{tpu_custom_call.1} parent=5 // pred_check_branch
        %216 = sbr.rel (%p214) target = $region32
      $region31: #{tpu_custom_call.1} parent=5 // pred_region
        // Predicated region
        $region33: #{tpu_custom_call.1} parent=31 // pred_check
          %p217 = pneg %p52
        $region34: #{tpu_custom_call.1} parent=31 // pred_check_branch
          %219 = sbr.rel (%p217) target = $region36
        $region35: #{tpu_custom_call.1} parent=31 // pred_region
          %s220 = sand.u32 %s42, 1
          %s221 = scalar_lea.sflag [#allocation4], %s220
          %s222 = sand.u32 %s42, 1
          %s223 = smul.addr %s222, 32
          %s224 = scalar_lea.vmem [#allocation3], %s223
          %s225 = smul.u32 8, %s25
          %s227 = ssub.s32 512, 512
          %228 = vsyncadd %s221, %s227
          %s229 = sadd.s32 %s26, %s225
          %s230 = smul.addr %s229, 64
          %s231 = scalar_lea.hbm %s0, %s230
          %s232 = sshll.u32 %s224, 4
          %s233 = int_to_ptr.vmem [resolvable:$true] %s232
          %238 = dma.hbm_to_vmem [thread:$0]  %s231, 512, %s233, %s221, 64, 64, 4
        $region36: #{tpu_custom_call.1} parent=31 // pred_fallthru
          _
      $region32: #{tpu_custom_call.1} parent=5 // pred_fallthru
        _
      %p239 = scmp.le.s32.totalorder 1, %s18
      %p240 = scmp.lt.s32.totalorder %s18, 3
      %p241 = pnand %p239, %p240
      %p242 = pneg %p241
      // Predicated region
      $region37: #{tpu_custom_call.1} parent=5 // pred_check
        _
      $region38: #{tpu_custom_call.1} parent=5 // pred_check_branch
        %244 = sbr.rel (%p241) target = $region40
      $region39: #{tpu_custom_call.1} parent=5 // pred_region
        %s245 = ssub.s32 %s18, 1
        %s246 = sand.u32 %s45, 1
        %s247 = scalar_lea.sflag [#allocation4], %s246
        %s248 = sand.u32 %s45, 1
        %s249 = smul.addr %s248, 32
        %s250 = scalar_lea.vmem [#allocation3], %s249
        // Predicated region
        $region41: #{tpu_custom_call.1} parent=39 // pred_check
          %p251 = pneg %p58
        $region42: #{tpu_custom_call.1} parent=39 // pred_check_branch
          %253 = sbr.rel (%p251) target = $region44
        $region43: #{tpu_custom_call.1} parent=39 // pred_region
          %254 = dma.done %s247, 512
        $region44: #{tpu_custom_call.1} parent=39 // pred_fallthru
          _
        // Predicated region
        $region45: #{tpu_custom_call.1} parent=39 // pred_check
          %p255 = pneg %p84
        $region46: #{tpu_custom_call.1} parent=39 // pred_check_branch
          %257 = sbr.rel (%p255) target = $region48
        $region47: #{tpu_custom_call.1} parent=39 // pred_region
          %258 = dma.done [#allocation7], 1024
        $region48: #{tpu_custom_call.1} parent=39 // pred_fallthru
          _
        %s259 = sand.u32 %s45, 1
        %s260 = scalar_lea.sflag [#allocation4], %s259
        %s261 = sand.u32 %s45, 1
        %s262 = smul.addr %s261, 32
        %s263 = scalar_lea.vmem [#allocation3], %s262
        %p264 = pneg %p58
        %p265 = pneg %p55
        %p266 = pneg %p84
        %p267 = pneg %p81
        %p268 = pneg %p105
        %p269 = pneg %p102
        %p270 = pneg %p126
        %p271 = pneg %p123
        %p272 = pneg %p147
        %p273 = pneg %p144
        %p274 = pneg %p173
        %p275 = pneg %p170
        %s276 = sand.u32 %s160, 1
        %s277 = scalar_lea.sflag [#allocation5], %s276
        %s278 = sand.u32 %s160, 1
        %s279 = smul.addr %s278, 32
        %s280 = scalar_lea.vmem [#allocation8], %s279
        %s281 = smul.u32 8, %s27
        %s282 = smul.u32 16, %s28
        %s283 = smul.u32 8, %s27
        %p285 = scmp.eq.s32.totalorder %s28, 0
        // Predicated region
        $region49: #{tpu_custom_call.1} parent=39 // pred_check
          %p286 = pneg %p285
        $region50: #{tpu_custom_call.1} parent=39 // pred_check_branch
          %288 = sbr.rel (%p286) target = $region52
        $region51: #{tpu_custom_call.1} parent=39 // pred_region
          %289 = vst [vmem:[#allocation2] sm:$0xff] 0.0
          %290 = vst [vmem:[#allocation2 + $0x8] sm:$0xff] 0.0
          %291 = vst [vmem:[#allocation2 + $0x10] sm:$0xff] 0.0
          %292 = vst [vmem:[#allocation2 + $0x18] sm:$0xff] 0.0
          %293 = vst [vmem:[#allocation2 + $0x20] sm:$0xff] 0.0
          %294 = vst [vmem:[#allocation2 + $0x28] sm:$0xff] 0.0
          %295 = vst [vmem:[#allocation2 + $0x30] sm:$0xff] 0.0
          %296 = vst [vmem:[#allocation2 + $0x38] sm:$0xff] 0.0
        $region52: #{tpu_custom_call.1} parent=39 // pred_fallthru
          _
        %v297 = vld [vmem:[#allocation2] sm:$0xff]
        %v298 = vld [vmem:[#allocation2 + $0x8] sm:$0xff]
        %v299 = vld [vmem:[#allocation2 + $0x10] sm:$0xff]
        %v300 = vld [vmem:[#allocation2 + $0x18] sm:$0xff]
        %v301 = vld [vmem:[#allocation2 + $0x20] sm:$0xff]
        %v302 = vld [vmem:[#allocation2 + $0x28] sm:$0xff]
        %v303 = vld [vmem:[#allocation2 + $0x30] sm:$0xff]
        %v304 = vld [vmem:[#allocation2 + $0x38] sm:$0xff]
        %v305 = vld [vmem:[%s250] sm:$0xf]
        %v306 = vld [vmem:[%s250 + $0x4] sm:$0xf]
        %v307 = vld [vmem:[%s250 + $0x8] sm:$0xf]
        %v308 = vld [vmem:[%s250 + $0xc] sm:$0xf]
        %v309 = vld [vmem:[%s250 + $0x10] sm:$0xf]
        %v310 = vld [vmem:[%s250 + $0x14] sm:$0xf]
        %v311 = vld [vmem:[%s250 + $0x18] sm:$0xf]
        %v312 = vld [vmem:[%s250 + $0x1c] sm:$0xf]
        %v313 = vld [vmem:[#allocation6] sm:$0xf]
        %v314 = vld [vmem:[#allocation6 + $0x4] sm:$0xf]
        %v315 = vld [vmem:[#allocation6 + $0x8] sm:$0xf]
        %v316 = vld [vmem:[#allocation6 + $0xc] sm:$0xf]
        %v317 = vld [vmem:[#allocation6 + $0x10] sm:$0xf]
        %v318 = vld [vmem:[#allocation6 + $0x14] sm:$0xf]
        %v319 = vld [vmem:[#allocation6 + $0x18] sm:$0xf]
        %v320 = vld [vmem:[#allocation6 + $0x1c] sm:$0xf]
        %v321 = vld [vmem:[#allocation6 + $0x20] sm:$0xf]
        %v322 = vld [vmem:[#allocation6 + $0x24] sm:$0xf]
        %v323 = vld [vmem:[#allocation6 + $0x28] sm:$0xf]
        %v324 = vld [vmem:[#allocation6 + $0x2c] sm:$0xf]
        %v325 = vld [vmem:[#allocation6 + $0x30] sm:$0xf]
        %v326 = vld [vmem:[#allocation6 + $0x34] sm:$0xf]
        %v327 = vld [vmem:[#allocation6 + $0x38] sm:$0xf]
        %v328 = vld [vmem:[#allocation6 + $0x3c] sm:$0xf]
        %v337 = vunpack.c.l.b16 %v305
        %v338 = vunpack.c.l.b16 %v306
        %v339 = vunpack.c.l.b16 %v307
        %v340 = vunpack.c.l.b16 %v308
        %v341 = vunpack.c.l.b16 %v309
        %v342 = vunpack.c.l.b16 %v310
        %v343 = vunpack.c.l.b16 %v311
        %v344 = vunpack.c.l.b16 %v312
        %v345 = vpack.c.b16 %v338, %v337
        %v346 = vpack.c.b16 %v340, %v339
        %v347 = vpack.c.b16 %v342, %v341
        %v348 = vpack.c.b16 %v344, %v343
        %v369 = vunpack.c.l.b16 %v313
        %v370 = vunpack.c.l.b16 %v314
        %v371 = vunpack.c.l.b16 %v315
        %v372 = vunpack.c.l.b16 %v316
        %v373 = vunpack.c.l.b16 %v317
        %v374 = vunpack.c.l.b16 %v318
        %v375 = vunpack.c.l.b16 %v319
        %v376 = vunpack.c.l.b16 %v320
        %v377 = vunpack.c.l.b16 %v321
        %v378 = vunpack.c.l.b16 %v322
        %v379 = vunpack.c.l.b16 %v323
        %v380 = vunpack.c.l.b16 %v324
        %v381 = vunpack.c.l.b16 %v325
        %v382 = vunpack.c.l.b16 %v326
        %v383 = vunpack.c.l.b16 %v327
        %v384 = vunpack.c.l.b16 %v328
        %v385 = vpack.c.b16 %v370, %v369
        %v386 = vpack.c.b16 %v372, %v371
        %v387 = vpack.c.b16 %v374, %v373
        %v388 = vpack.c.b16 %v376, %v375
        %v389 = vpack.c.b16 %v378, %v377
        %v390 = vpack.c.b16 %v380, %v379
        %v391 = vpack.c.b16 %v382, %v381
        %v392 = vpack.c.b16 %v384, %v383
        %401 = vmatprep.subr.bf16.mxu0 0
        %402 = vmatpush1.bf16.msra.mxu0 %v385
        %403 = vmatprep.subr.bf16.mxu0 0
        %404 = vmatpush1.bf16.msra.mxu0 %v386
        %405 = vmatprep.subr.bf16.mxu0 0
        %406 = vmatpush1.bf16.msra.mxu0 %v387
        %407 = vmatprep.subr.bf16.mxu0 0
        %408 = vmatpush1.bf16.msra.mxu0 %v388
        %409 = vmatprep.subr.bf16.mxu0 0
        %410 = vmatpush1.bf16.msra.mxu0 %v389
        %411 = vmatprep.subr.bf16.mxu0 0
        %412 = vmatpush1.bf16.msra.mxu0 %v390
        %413 = vmatprep.subr.bf16.mxu0 0
        %414 = vmatpush1.bf16.msra.mxu0 %v391
        %415 = vmatprep.subr.bf16.mxu0 0
        %416 = vmatpush1.bf16.msra.mxu0 %v392
        %417 = vmatprep.subr.bf16.mxu0 0
        %418 = vmatpush1.bf16.msra.mxu0 0
        %419 = vmatprep.subr.bf16.mxu0 0
        %420 = vmatpush1.bf16.msra.mxu0 0
        %421 = vmatprep.subr.bf16.mxu0 0
        %422 = vmatpush1.bf16.msra.mxu0 0
        %423 = vmatprep.subr.bf16.mxu0 0
        %424 = vmatpush1.bf16.msra.mxu0 0
        %425 = vmatprep.subr.bf16.mxu0 0
        %426 = vmatpush1.bf16.msra.mxu0 0
        %427 = vmatprep.subr.bf16.mxu0 0
        %428 = vmatpush1.bf16.msra.mxu0 0
        %429 = vmatprep.subr.bf16.mxu0 0
        %430 = vmatpush1.bf16.msra.mxu0 0
        %431 = vmatprep.subr.bf16.mxu0 0
        %432 = vmatpush1.bf16.msra.mxu0 0
        %433 = vmatprep.mubr.bf16.mxu0 0
        %434 = vmatmul.mubr.bf16.gmra.mrb[0].mxu0 %v345
        %v435 = vpop.f32.mrb[0].mxu0
        %v436 = vadd.f32 0.0, %v435
        %v437 = vpop.f32.mrb[0].mxu0
        %v438 = vpop.f32.mrb[0].mxu0
        %v439 = vadd.f32 0.0, %v438
        %v440 = vpop.f32.mrb[0].mxu0
        %441 = vmatprep.mubr.bf16.mxu0 0
        %442 = vmatmul.mubr.bf16.gmra.mrb[0].mxu0 %v346
        %v443 = vpop.f32.mrb[0].mxu0
        %v444 = vadd.f32 0.0, %v443
        %v445 = vpop.f32.mrb[0].mxu0
        %v446 = vpop.f32.mrb[0].mxu0
        %v447 = vadd.f32 0.0, %v446
        %v448 = vpop.f32.mrb[0].mxu0
        %449 = vmatprep.mubr.bf16.mxu0 0
        %450 = vmatmul.mubr.bf16.gmra.mrb[0].mxu0 %v347
        %v451 = vpop.f32.mrb[0].mxu0
        %v452 = vadd.f32 0.0, %v451
        %v453 = vpop.f32.mrb[0].mxu0
        %v454 = vpop.f32.mrb[0].mxu0
        %v455 = vadd.f32 0.0, %v454
        %v456 = vpop.f32.mrb[0].mxu0
        %457 = vmatprep.mubr.bf16.mxu0 0
        %458 = vmatmul.mubr.bf16.gmra.mrb[0].mxu0 %v348
        %v459 = vpop.f32.mrb[0].mxu0
        %v460 = vadd.f32 0.0, %v459
        %v461 = vpop.f32.mrb[0].mxu0
        %v462 = vpop.f32.mrb[0].mxu0
        %v463 = vadd.f32 0.0, %v462
        %v464 = vpop.f32.mrb[0].mxu0
        %465 = vdwg.mxu0
        %v466 = vadd.f32 %v297, %v436
        %v467 = vadd.f32 %v298, %v439
        %v468 = vadd.f32 %v299, %v444
        %v469 = vadd.f32 %v300, %v447
        %v470 = vadd.f32 %v301, %v452
        %v471 = vadd.f32 %v302, %v455
        %v472 = vadd.f32 %v303, %v460
        %v473 = vadd.f32 %v304, %v463
        %474 = vst [vmem:[#allocation2] sm:$0xff] %v466
        %475 = vst [vmem:[#allocation2 + $0x8] sm:$0xff] %v467
        %476 = vst [vmem:[#allocation2 + $0x10] sm:$0xff] %v468
        %477 = vst [vmem:[#allocation2 + $0x18] sm:$0xff] %v469
        %478 = vst [vmem:[#allocation2 + $0x20] sm:$0xff] %v470
        %479 = vst [vmem:[#allocation2 + $0x28] sm:$0xff] %v471
        %480 = vst [vmem:[#allocation2 + $0x30] sm:$0xff] %v472
        %481 = vst [vmem:[#allocation2 + $0x38] sm:$0xff] %v473
        // Predicated region
        $region53: #{tpu_custom_call.1} parent=39 // pred_check
          %p482 = pneg %p285
        $region54: #{tpu_custom_call.1} parent=39 // pred_check_branch
          %484 = sbr.rel (%p482) target = $region56
        $region55: #{tpu_custom_call.1} parent=39 // pred_region
          %v485 = vld [vmem:[#allocation2] sm:$0xff]
          %v486 = vld [vmem:[#allocation2 + $0x8] sm:$0xff]
          %v487 = vld [vmem:[#allocation2 + $0x10] sm:$0xff]
          %v488 = vld [vmem:[#allocation2 + $0x18] sm:$0xff]
          %v489 = vld [vmem:[#allocation2 + $0x20] sm:$0xff]
          %v490 = vld [vmem:[#allocation2 + $0x28] sm:$0xff]
          %v491 = vld [vmem:[#allocation2 + $0x30] sm:$0xff]
          %v492 = vld [vmem:[#allocation2 + $0x38] sm:$0xff]
          %v493 = vld [vmem:[%s2] sm:$0x1]
          %v495 = vlaneseq
          %v496 = vshrl.u32 %v495, 7
          %v497 = vsub.s32 0, %v496
          %v498 = vrot.slane %v493, %v497
          %v500 = vadd.f32 %v485, %v498
          %v501 = vadd.f32 %v486, %v498
          %v502 = vadd.f32 %v487, %v498
          %v503 = vadd.f32 %v488, %v498
          %v504 = vadd.f32 %v489, %v498
          %v505 = vadd.f32 %v490, %v498
          %v506 = vadd.f32 %v491, %v498
          %v507 = vadd.f32 %v492, %v498
          %vm508 = vcmp.ge.f32.partialorder %v500, 0.0
          %vm509 = vcmp.ge.f32.partialorder %v501, 0.0
          %vm510 = vcmp.ge.f32.partialorder %v502, 0.0
          %vm511 = vcmp.ge.f32.partialorder %v503, 0.0
          %vm512 = vcmp.ge.f32.partialorder %v504, 0.0
          %vm513 = vcmp.ge.f32.partialorder %v505, 0.0
          %vm514 = vcmp.ge.f32.partialorder %v506, 0.0
          %vm515 = vcmp.ge.f32.partialorder %v507, 0.0
          %v516 = vmul.f32 %v500, 0.01
          %v517 = vmul.f32 %v501, 0.01
          %v518 = vmul.f32 %v502, 0.01
          %v519 = vmul.f32 %v503, 0.01
          %v520 = vmul.f32 %v504, 0.01
          %v521 = vmul.f32 %v505, 0.01
          %v522 = vmul.f32 %v506, 0.01
          %v523 = vmul.f32 %v507, 0.01
          %v524 = vsel %vm508, %v500, %v516
          %v525 = vsel %vm509, %v501, %v517
          %v526 = vsel %vm510, %v502, %v518
          %v527 = vsel %vm511, %v503, %v519
          %v528 = vsel %vm512, %v504, %v520
          %v529 = vsel %vm513, %v505, %v521
          %v530 = vsel %vm514, %v506, %v522
          %v531 = vsel %vm515, %v507, %v523
          %v532 = vld [vmem:[%s3] sm:$0x1]
          %v533 = vld [vmem:[%s4] sm:$0x1]
          %534 = vadd.xlane.f32.xlu0 %v524
          %v535 = vpop.xlane.xlu0 %534
          %536 = vadd.xlane.f32.xlu0 %v525
          %v537 = vpop.xlane.xlu0 %536
          %538 = vadd.xlane.f32.xlu0 %v526
          %v539 = vpop.xlane.xlu0 %538
          %540 = vadd.xlane.f32.xlu0 %v527
          %v541 = vpop.xlane.xlu0 %540
          %542 = vadd.xlane.f32.xlu0 %v528
          %v543 = vpop.xlane.xlu0 %542
          %544 = vadd.xlane.f32.xlu0 %v529
          %v545 = vpop.xlane.xlu0 %544
          %546 = vadd.xlane.f32.xlu0 %v530
          %v547 = vpop.xlane.xlu0 %546
          %548 = vadd.xlane.f32.xlu0 %v531
          %v549 = vpop.xlane.xlu0 %548
          %v550 = vrcp.pop 128.0
          %v551 = vmul.f32 %v535, %v550
          %v552 = vmul.f32 %v537, %v550
          %v553 = vmul.f32 %v539, %v550
          %v554 = vmul.f32 %v541, %v550
          %v555 = vmul.f32 %v543, %v550
          %v556 = vmul.f32 %v545, %v550
          %v557 = vmul.f32 %v547, %v550
          %v558 = vmul.f32 %v549, %v550
          %v559 = vsub.f32 %v524, %v551
          %v560 = vsub.f32 %v525, %v552
          %v561 = vsub.f32 %v526, %v553
          %v562 = vsub.f32 %v527, %v554
          %v563 = vsub.f32 %v528, %v555
          %v564 = vsub.f32 %v529, %v556
          %v565 = vsub.f32 %v530, %v557
          %v566 = vsub.f32 %v531, %v558
          %v567 = vmul.f32 %v559, %v559
          %v568 = vmul.f32 %v560, %v560
          %v569 = vmul.f32 %v561, %v561
          %v570 = vmul.f32 %v562, %v562
          %v571 = vmul.f32 %v563, %v563
          %v572 = vmul.f32 %v564, %v564
          %v573 = vmul.f32 %v565, %v565
          %v574 = vmul.f32 %v566, %v566
          %575 = vadd.xlane.f32.xlu0 %v567
          %v576 = vpop.xlane.xlu0 %575
          %577 = vadd.xlane.f32.xlu0 %v568
          %v578 = vpop.xlane.xlu0 %577
          %579 = vadd.xlane.f32.xlu0 %v569
          %v580 = vpop.xlane.xlu0 %579
          %581 = vadd.xlane.f32.xlu0 %v570
          %v582 = vpop.xlane.xlu0 %581
          %583 = vadd.xlane.f32.xlu0 %v571
          %v584 = vpop.xlane.xlu0 %583
          %585 = vadd.xlane.f32.xlu0 %v572
          %v586 = vpop.xlane.xlu0 %585
          %587 = vadd.xlane.f32.xlu0 %v573
          %v588 = vpop.xlane.xlu0 %587
          %589 = vadd.xlane.f32.xlu0 %v574
          %v590 = vpop.xlane.xlu0 %589
          %v591 = vmul.f32 %v576, %v550
          %v592 = vmul.f32 %v578, %v550
          %v593 = vmul.f32 %v580, %v550
          %v594 = vmul.f32 %v582, %v550
          %v595 = vmul.f32 %v584, %v550
          %v596 = vmul.f32 %v586, %v550
          %v597 = vmul.f32 %v588, %v550
          %v598 = vmul.f32 %v590, %v550
          %v599 = vadd.f32 %v591, 1e-05
          %v600 = vadd.f32 %v592, 1e-05
          %v601 = vadd.f32 %v593, 1e-05
          %v602 = vadd.f32 %v594, 1e-05
          %v603 = vadd.f32 %v595, 1e-05
          %v604 = vadd.f32 %v596, 1e-05
          %v605 = vadd.f32 %v597, 1e-05
          %v606 = vadd.f32 %v598, 1e-05
          %v607 = vrsqrt.pop %v599
          %v608 = vrsqrt.pop %v600
          %v609 = vrsqrt.pop %v601
          %v610 = vrsqrt.pop %v602
          %v611 = vrsqrt.pop %v603
          %v612 = vrsqrt.pop %v604
          %v613 = vrsqrt.pop %v605
          %v614 = vrsqrt.pop %v606
          %v615 = vmul.f32 %v559, %v607
          %v616 = vmul.f32 %v560, %v608
          %v617 = vmul.f32 %v561, %v609
          %v618 = vmul.f32 %v562, %v610
          %v619 = vmul.f32 %v563, %v611
          %v620 = vmul.f32 %v564, %v612
          %v621 = vmul.f32 %v565, %v613
          %v622 = vmul.f32 %v566, %v614
          %v624 = vlaneseq
          %v625 = vshrl.u32 %v624, 7
          %v626 = vsub.s32 0, %v625
          %v627 = vrot.slane %v532, %v626
          %v629 = vmul.f32 %v615, %v627
          %v630 = vmul.f32 %v616, %v627
          %v631 = vmul.f32 %v617, %v627
          %v632 = vmul.f32 %v618, %v627
          %v633 = vmul.f32 %v619, %v627
          %v634 = vmul.f32 %v620, %v627
          %v635 = vmul.f32 %v621, %v627
          %v636 = vmul.f32 %v622, %v627
          %v638 = vlaneseq
          %v639 = vshrl.u32 %v638, 7
          %v640 = vsub.s32 0, %v639
          %v641 = vrot.slane %v533, %v640
          %v643 = vadd.f32 %v629, %v641
          %v644 = vadd.f32 %v630, %v641
          %v645 = vadd.f32 %v631, %v641
          %v646 = vadd.f32 %v632, %v641
          %v647 = vadd.f32 %v633, %v641
          %v648 = vadd.f32 %v634, %v641
          %v649 = vadd.f32 %v635, %v641
          %v650 = vadd.f32 %v636, %v641
          %v651 = vpack.c.bf16 %v644, %v643
          %v652 = vpack.c.bf16 %v646, %v645
          %v653 = vpack.c.bf16 %v648, %v647
          %v654 = vpack.c.bf16 %v650, %v649
          %v659 = vunpack.c.l.b16 %v651
          %v660 = vunpack.c.h.b16 %v651
          %v661 = vunpack.c.l.b16 %v652
          %v662 = vunpack.c.h.b16 %v652
          %v663 = vunpack.c.l.b16 %v653
          %v664 = vunpack.c.h.b16 %v653
          %v665 = vunpack.c.l.b16 %v654
          %v666 = vunpack.c.h.b16 %v654
          %v667 = vpack.c.b16 %v659, %v659
          %v668 = vpack.c.b16 %v660, %v660
          %v669 = vpack.c.b16 %v661, %v661
          %v670 = vpack.c.b16 %v662, %v662
          %v671 = vpack.c.b16 %v663, %v663
          %v672 = vpack.c.b16 %v664, %v664
          %v673 = vpack.c.b16 %v665, %v665
          %v674 = vpack.c.b16 %v666, %v666
          %683 = vst [vmem:[%s280] sm:$0xf] %v667
          %684 = vst [vmem:[%s280 + $0x4] sm:$0xf] %v668
          %685 = vst [vmem:[%s280 + $0x8] sm:$0xf] %v669
          %686 = vst [vmem:[%s280 + $0xc] sm:$0xf] %v670
          %687 = vst [vmem:[%s280 + $0x10] sm:$0xf] %v671
          %688 = vst [vmem:[%s280 + $0x14] sm:$0xf] %v672
          %689 = vst [vmem:[%s280 + $0x18] sm:$0xf] %v673
          %690 = vst [vmem:[%s280 + $0x1c] sm:$0xf] %v674
        $region56: #{tpu_custom_call.1} parent=39 // pred_fallthru
          _
        %s691 = sand.u32 %s160, 1
        %s692 = scalar_lea.sflag [#allocation5], %s691
        %s693 = sand.u32 %s160, 1
        %s694 = smul.addr %s693, 32
        %s695 = scalar_lea.vmem [#allocation8], %s694
        // Predicated region
        $region57: #{tpu_custom_call.1} parent=39 // pred_check
          %p696 = pneg %p170
        $region58: #{tpu_custom_call.1} parent=39 // pred_check_branch
          %698 = sbr.rel (%p696) target = $region60
        $region59: #{tpu_custom_call.1} parent=39 // pred_region
          %s699 = smul.u32 8, %s27
          %s701 = ssub.s32 512, 512
          %702 = vsyncadd %s692, %s701
          %s703 = smul.addr %s699, 64
          %s704 = scalar_lea.hbm %s5, %s703
          %s705 = sshll.u32 %s695, 4
          %s706 = int_to_ptr.vmem [resolvable:$true] %s705
          %711 = dma.vmem_to_hbm [thread:$0]  %s706, 512, %s704, %s692, 64, 64, 4
        $region60: #{tpu_custom_call.1} parent=39 // pred_fallthru
          _
      $region40: #{tpu_custom_call.1} parent=5 // pred_fallthru
        _
      %p712 = scmp.le.s32.totalorder 2, %s18
      // Predicated region
      $region61: #{tpu_custom_call.1} parent=5 // pred_check
        %p713 = pneg %p712
      $region62: #{tpu_custom_call.1} parent=5 // pred_check_branch
        %715 = sbr.rel (%p713) target = $region64
      $region63: #{tpu_custom_call.1} parent=5 // pred_region
        %s716 = ssub.s32 %s18, 2
        // Predicated region
        $region65: #{tpu_custom_call.1} parent=63 // pred_check
          %p717 = pneg %p176
        $region66: #{tpu_custom_call.1} parent=63 // pred_check_branch
          %719 = sbr.rel (%p717) target = $region68
        $region67: #{tpu_custom_call.1} parent=63 // pred_region
          %s720 = sand.u32 %s161, 1
          %s721 = scalar_lea.sflag [#allocation5], %s720
          %s722 = sand.u32 %s161, 1
          %s723 = smul.addr %s722, 32
          %s724 = scalar_lea.vmem [#allocation8], %s723
          %725 = dma.done %s721, 512
        $region68: #{tpu_custom_call.1} parent=63 // pred_fallthru
          _
      $region64: #{tpu_custom_call.1} parent=5 // pred_fallthru
        _
    $region6: #{tpu_custom_call.1} parent=1 // loop_footer
      %s22 = sadd.s32 1, %s18
    $region7: #{tpu_custom_call.1} parent=1 // loop_footer_branch
      %17 = sbr.rel target = $region3
    $region8: #{tpu_custom_call.1} parent=1 // loop_exit
      _
    %726 = vsyncpa [#allocation4], 1
    %s727 = scalar_lea.sflag [#allocation4], 1
    %728 = vsyncpa %s727, 1
    %729 = vsyncpa [#allocation7], 1
    %730 = vsyncpa [#allocation5], 1
    %s731 = scalar_lea.sflag [#allocation5], 1
    %732 = vsyncpa %s731, 1

</llo_original>
